<compile_context>
chip_gen: v7x
topology: tpu7x:2x2x1
jax: 0.10.0
libtpu: 0.0.40
codegen_flags: <defaults>
</compile_context>

<pallas_src>
from dataclasses import dataclass

import jax
import jax.numpy as jnp
from jax.experimental import pallas as pl
from jax.experimental.pallas import tpu as pltpu

LN_EPS = 1e-5   # PyTorch LayerNorm default
LANE = 128
SUBLANE = 8


@dataclass(frozen=True)
class ProcessingSettings:
    true_history_frame_len: int
    frame_seq_len_screening_rate: int
    history_second_screening_rate: int


def _round_up(x, m):
    return ((x + m - 1) // m) * m


def _layernorm(x, gamma, beta):
    # PyTorch LayerNorm: biased variance over last dim, eps inside rsqrt.
    mu = jnp.mean(x, axis=-1, keepdims=True)
    var = jnp.mean((x - mu) * (x - mu), axis=-1, keepdims=True)
    return (x - mu) * jax.lax.rsqrt(var + LN_EPS) * gamma + beta


def _memory_model_kernel(
    x_ref,                                          # (Tsub, TB, S) bf16
    w_enc_ref, b_enc_ref, g_enc_ref, be_enc_ref,    # encoder: Linear(S,H) + LN(H)
    w_mu_ref, b_mu_ref,                             # fc_mu:   Linear(H,Hp)  (cols 0-padded)
    w_d1_ref, b_d1_ref, g_d1_ref, be_d1_ref,        # decoder: Linear(Hp,H) + LN(H)
    w_d2_ref, b_d2_ref,                             # decoder: Linear(H,Ap)  (cols 0-padded)
    res_ref, latent_ref,
):
    f32 = jnp.float32
    bf16 = jnp.bfloat16

    tsub = x_ref.shape[0]
    tb = x_ref.shape[1]
    H = w_enc_ref.shape[1]

    # Hoist resident params out of the time loop (JAX does not CSE broadcasts).
    w_enc = w_enc_ref[...]
    b_enc = b_enc_ref[...]
    g_enc = g_enc_ref[...]
    be_enc = be_enc_ref[...]

    # ---- encoder per time step + running sum (replaces the pool matmul) ----
    def enc_step(t, acc):
        h = jnp.dot(x_ref[t], w_enc, preferred_element_type=f32) + b_enc
        h = jnp.maximum(h, 0.0)
        h = _layernorm(h, g_enc, be_enc)
        return acc + h

    m = jax.lax.fori_loop(0, tsub, enc_step,
                          jnp.zeros((tb, H), f32), unroll=True)
    m = m * (1.0 / tsub)                                              # mean over time

    # ---- fc_mu -> latent (lane-padded to Hp; pad lanes are exactly 0) ----
    latent = jnp.dot(m.astype(bf16), w_mu_ref[...],
                     preferred_element_type=f32) + b_mu_ref[...]      # (TB, Hp)
    latent_ref[...] = latent.astype(latent_ref.dtype)

    # ---- decoder: Linear + ReLU + LN + Linear ----
    d = jnp.dot(latent.astype(bf16), w_d1_ref[...],
                preferred_element_type=f32) + b_d1_ref[...]           # (TB, H)
    d = jnp.maximum(d, 0.0)
    d = _layernorm(d, g_d1_ref[...], be_d1_ref[...])
    res = jnp.dot(d.astype(bf16), w_d2_ref[...],
                  preferred_element_type=f32) + b_d2_ref[...]         # (TB, Ap)
    res_ref[...] = res.astype(res_ref.dtype)


def _estimate_vmem_bytes(TB, Tsub, S, H, Hp, Ap, param_bytes):
    x_tile = TB * Tsub * S * 2                 # bf16 streamed input block
    out_tiles = TB * (Ap + Hp) * 4             # f32 output blocks
    temps = TB * (2 * H + Hp + Ap) * 4         # rough in-kernel live temporaries
    # inputs/outputs double-buffered by the pipeline; params conservatively x2
    return 2 * x_tile + 2 * out_tiles + 2 * param_bytes + temps + (2 << 20)


def memory_model_forward(x, params, proc: ProcessingSettings, *, batch_tile=1024):
    """x: [B, T, S] f32 -> (res [B, A] f32, latent [B, H] f32)."""
    assert x.ndim == 3
    assert x.shape[1] == (proc.true_history_frame_len
                          // proc.frame_seq_len_screening_rate), x.shape

    # Sequence subsampling (strided slice) done here so dropped frames are
    # never loaded by the kernel.
    xs = x[:, ::proc.history_second_screening_rate, :]                # [B, T', S]
    B, Tsub, S = xs.shape
    H = params["w_enc"].shape[1]
    A = params["w_d2"].shape[1]
    Hp = _round_up(H, LANE)
    Ap = _round_up(A, LANE)

    # Lane-pad output-facing weights/biases with zeros (mathematically exact).
    w_mu = jnp.pad(params["w_mu"], ((0, 0), (0, Hp - H)))
    b_mu = jnp.pad(params["b_mu"], ((0, 0), (0, Hp - H)))
    w_d1 = jnp.pad(params["w_d1"], ((0, Hp - H), (0, 0)))
    w_d2 = jnp.pad(params["w_d2"], ((0, 0), (0, Ap - A)))
    b_d2 = jnp.pad(params["b_d2"], ((0, 0), (0, Ap - A)))

    resident_ops = (
        params["w_enc"], params["b_enc"], params["g_enc"], params["be_enc"],
        w_mu, b_mu,
        w_d1, params["b_d1"], params["g_d1"], params["be_d1"],
        w_d2, b_d2,
    )
    param_bytes = sum(int(a.size) * a.dtype.itemsize for a in resident_ops)

    # --- batch tiling ---------------------------------------------------
    # Target >=2 grid steps when the batch permits (v7x has 2 TensorCores),
    # keep TB a multiple of the sublane count, clamp to batch_tile and to an
    # explicit VMEM budget (portable to v7x's 64 MiB physical VMEM).
    batch_tile = max(SUBLANE, _round_up(batch_tile, SUBLANE))
    TB = max(SUBLANE, min(batch_tile, _round_up(pl.cdiv(B, 2), SUBLANE)))
    while _estimate_vmem_bytes(TB, Tsub, S, H, Hp, Ap, param_bytes) > (40 << 20) \
            and TB > SUBLANE:
        TB = max(SUBLANE, _round_up(TB // 2, SUBLANE))
    Bp = pl.cdiv(B, TB) * TB

    # x laid out [Tsub, Bp, S] in bf16: batch-tiled minor dims stay (TB, S),
    # halved DMA bytes, and x_ref[t] slabs need no in-kernel reshape.
    x3 = jnp.transpose(xs, (1, 0, 2)).astype(jnp.bfloat16)            # [Tsub, B, S]
    if Bp != B:
        x3 = jnp.pad(x3, ((0, 0), (0, Bp - B), (0, 0)))

    operands = (x3,) + resident_ops

    def resident(arr):
        # Full-array block with a constant index_map: same VMEM-resident tile
        # every grid step (shape captured per call -> no late-binding hazard).
        return pl.BlockSpec(arr.shape, lambda i: (0,) * arr.ndim)

    in_specs = (
        [pl.BlockSpec((Tsub, TB, S), lambda i: (0, i, 0))]   # batch-tiled input
        + [resident(a) for a in resident_ops]
    )
    out_specs = (
        pl.BlockSpec((TB, Ap), lambda i: (i, 0)),
        pl.BlockSpec((TB, Hp), lambda i: (i, 0)),
    )
    out_shape = (
        jax.ShapeDtypeStruct((Bp, Ap), jnp.float32),
        jax.ShapeDtypeStruct((Bp, Hp), jnp.float32),
    )

    vmem_needed = _estimate_vmem_bytes(TB, Tsub, S, H, Hp, Ap, param_bytes)
    vmem_limit = int(min(48 << 20, max(16 << 20, vmem_needed)))

    flops = int(2 * Bp * (Tsub * S * H + H * Hp + Hp * H + H * Ap))
    transcendentals = int(Bp * (Tsub + 1))          # rsqrt per LayerNorm row
    bytes_accessed = int(
        x3.size * 2 + param_bytes + Bp * (Ap + Hp) * 4)

    res_pad, latent_pad = pl.pallas_call(
        _memory_model_kernel,
        grid=(Bp // TB,),
        in_specs=in_specs,
        out_specs=out_specs,
        out_shape=out_shape,
        compiler_params=pltpu.CompilerParams(
            dimension_semantics=("parallel",),
            vmem_limit_bytes=vmem_limit),
        cost_estimate=pl.CostEstimate(
            flops=flops,
            transcendentals=transcendentals,
            bytes_accessed=bytes_accessed),
    )(*operands)

    return res_pad[:B, :A], latent_pad[:B, :H]


def init_params(key, state_space_size, hidden_size, action_space_size):
    """Deterministic synthetic params matching the PyTorch module's shapes.

    Weight matrices stored bf16 (halves HBM/VMEM traffic; f32 MXU accumulation
    in the kernel); biases and LayerNorm affine params stay f32.
    """
    S, H, A = state_space_size, hidden_size, action_space_size
    ks = jax.random.split(key, 4)

    def lin(k, fan_in, fan_out):
        bound = 1.0 / jnp.sqrt(jnp.float32(fan_in))
        kw, kb = jax.random.split(k)
        w = jax.random.uniform(kw, (fan_in, fan_out), jnp.float32, -bound, bound)
        b = jax.random.uniform(kb, (1, fan_out), jnp.float32, -bound, bound)
        return w.astype(jnp.bfloat16), b

    w_enc, b_enc = lin(ks[0], S, H)
    w_mu, b_mu = lin(ks[1], H, H)
    w_d1, b_d1 = lin(ks[2], H, H)
    w_d2, b_d2 = lin(ks[3], H, A)

    ones = jnp.ones((1, H), jnp.float32)
    zeros = jnp.zeros((1, H), jnp.float32)

    return {
        "w_enc": w_enc, "b_enc": b_enc, "g_enc": ones, "be_enc": zeros,
        "w_mu": w_mu, "b_mu": b_mu,
        "w_d1": w_d1, "b_d1": b_d1, "g_d1": ones, "be_d1": zeros,
        "w_d2": w_d2, "b_d2": b_d2,
    }


def _reference(x, params, proc):
    """Plain-JAX f32 reference mirroring the PyTorch forward."""
    f32 = jnp.float32
    xs = x[:, ::proc.history_second_screening_rate, :]
    h = jnp.maximum(xs @ params["w_enc"].astype(f32) + params["b_enc"], 0.0)
    h = _layernorm(h, params["g_enc"], params["be_enc"])
    m = jnp.mean(h, axis=1)
    latent = m @ params["w_mu"].astype(f32) + params["b_mu"]
    d = jnp.maximum(latent @ params["w_d1"].astype(f32) + params["b_d1"], 0.0)
    d = _layernorm(d, params["g_d1"], params["be_d1"])
    res = d @ params["w_d2"].astype(f32) + params["b_d2"]
    return res, latent


if __name__ == "__main__":
    # Small shapes consistent with the module's forward.
    B = 4
    state_space_size = 16      # S (features)
    hidden_size = 32           # H
    action_space_size = 6      # A
    proc = ProcessingSettings(true_history_frame_len=16,
                              frame_seq_len_screening_rate=2,
                              history_second_screening_rate=2)
    T = proc.true_history_frame_len // proc.frame_seq_len_screening_rate  # 8

    key = jax.random.PRNGKey(0)
    k_x, k_p = jax.random.split(key)
    x = jax.random.normal(k_x, (B, T, state_space_size), jnp.float32)
    params = init_params(k_p, state_space_size, hidden_size, action_space_size)

    res, latent = memory_model_forward(x, params, proc)
    res, latent = jax.block_until_ready((res, latent))

    ref_res, ref_latent = _reference(x, params, proc)
    assert res.shape == (B, action_space_size)
    assert latent.shape == (B, hidden_size)
    # Tolerance accounts for bf16 weights / bf16 matmul inputs (f32 accumulate)
    # vs the pure-f32 reference.
    assert jnp.allclose(latent, ref_latent, atol=2e-2, rtol=2e-2), "latent mismatch"
    assert jnp.allclose(res, ref_res, atol=2e-2, rtol=2e-2), "res mismatch"

    print("KERNEL_OK")
</pallas_src>

<mosaic_0001>
module attributes {stable_mosaic.version = 11 : i64} {
  func.func @_memory_model_kernel(%arg0: i32, %arg1: memref<4x8x16xbf16, #tpu.memory_space<vmem>>, %arg2: memref<16x32xbf16, #tpu.memory_space<vmem>>, %arg3: memref<1x32xf32, #tpu.memory_space<vmem>>, %arg4: memref<1x32xf32, #tpu.memory_space<vmem>>, %arg5: memref<1x32xf32, #tpu.memory_space<vmem>>, %arg6: memref<32x128xbf16, #tpu.memory_space<vmem>>, %arg7: memref<1x128xf32, #tpu.memory_space<vmem>>, %arg8: memref<128x32xbf16, #tpu.memory_space<vmem>>, %arg9: memref<1x32xf32, #tpu.memory_space<vmem>>, %arg10: memref<1x32xf32, #tpu.memory_space<vmem>>, %arg11: memref<1x32xf32, #tpu.memory_space<vmem>>, %arg12: memref<32x128xbf16, #tpu.memory_space<vmem>>, %arg13: memref<1x128xf32, #tpu.memory_space<vmem>>, %arg14: memref<8x128xf32, #tpu.memory_space<vmem>>, %arg15: memref<8x128xf32, #tpu.memory_space<vmem>>) attributes {dimension_semantics = [#tpu.dimension_semantics<parallel>], iteration_bounds = array<i64: 1>, scalar_prefetch = 0 : i64, scratch_operands = 0 : i64, tpu.core_type = #tpu.core_type<tc>, window_params = [{transform_indices = @transform_0, window_bounds = array<i64: 4, 8, 16>}, {pipeline_mode = #tpu.pipeline_mode<synchronous>, transform_indices = @transform_1, window_bounds = array<i64: 16, 32>}, {pipeline_mode = #tpu.pipeline_mode<synchronous>, transform_indices = @transform_2, window_bounds = array<i64: 1, 32>}, {pipeline_mode = #tpu.pipeline_mode<synchronous>, transform_indices = @transform_3, window_bounds = array<i64: 1, 32>}, {pipeline_mode = #tpu.pipeline_mode<synchronous>, transform_indices = @transform_4, window_bounds = array<i64: 1, 32>}, {pipeline_mode = #tpu.pipeline_mode<synchronous>, transform_indices = @transform_5, window_bounds = array<i64: 32, 128>}, {pipeline_mode = #tpu.pipeline_mode<synchronous>, transform_indices = @transform_6, window_bounds = array<i64: 1, 128>}, {pipeline_mode = #tpu.pipeline_mode<synchronous>, transform_indices = @transform_7, window_bounds = array<i64: 128, 32>}, {pipeline_mode = #tpu.pipeline_mode<synchronous>, transform_indices = @transform_8, window_bounds = array<i64: 1, 32>}, {pipeline_mode = #tpu.pipeline_mode<synchronous>, transform_indices = @transform_9, window_bounds = array<i64: 1, 32>}, {pipeline_mode = #tpu.pipeline_mode<synchronous>, transform_indices = @transform_10, window_bounds = array<i64: 1, 32>}, {pipeline_mode = #tpu.pipeline_mode<synchronous>, transform_indices = @transform_11, window_bounds = array<i64: 32, 128>}, {pipeline_mode = #tpu.pipeline_mode<synchronous>, transform_indices = @transform_12, window_bounds = array<i64: 1, 128>}, {transform_indices = @transform_13, window_bounds = array<i64: 8, 128>}, {transform_indices = @transform_14, window_bounds = array<i64: 8, 128>}]} {
    %c0 = arith.constant 0 : index
    %c0_0 = arith.constant 0 : index
    %0 = vector.load %arg2[%c0, %c0_0] : memref<16x32xbf16, #tpu.memory_space<vmem>>, vector<16x32xbf16>
    %c0_1 = arith.constant 0 : index
    %c0_2 = arith.constant 0 : index
    %1 = vector.load %arg3[%c0_1, %c0_2] : memref<1x32xf32, #tpu.memory_space<vmem>>, vector<1x32xf32>
    %c0_3 = arith.constant 0 : index
    %c0_4 = arith.constant 0 : index
    %2 = vector.load %arg4[%c0_3, %c0_4] : memref<1x32xf32, #tpu.memory_space<vmem>>, vector<1x32xf32>
    %c0_5 = arith.constant 0 : index
    %c0_6 = arith.constant 0 : index
    %3 = vector.load %arg5[%c0_5, %c0_6] : memref<1x32xf32, #tpu.memory_space<vmem>>, vector<1x32xf32>
    %cst = arith.constant 0.000000e+00 : f32
    %4 = vector.broadcast %cst : f32 to vector<8x32xf32>
    %c0_i32 = arith.constant 0 : i32
    %5 = arith.index_cast %c0_i32 : i32 to index
    %c0_7 = arith.constant 0 : index
    %c0_8 = arith.constant 0 : index
    %6 = vector.load %arg1[%5, %c0_7, %c0_8] : memref<4x8x16xbf16, #tpu.memory_space<vmem>>, vector<1x8x16xbf16>
    %7 = vector.shape_cast %6 : vector<1x8x16xbf16> to vector<8x16xbf16>
    %cst_9 = arith.constant dense<0.000000e+00> : vector<8x32xf32>
    %8 = tpu.matmul %7, %0, %cst_9 {dimension_numbers = #tpu.dot_dimension_numbers<[1], [0], [0], [1], [0, 0, 1, 1], [], []>} : vector<8x16xbf16>, vector<16x32xbf16>, vector<8x32xf32> -> vector<8x32xf32>
    %9 = vector.broadcast %1 : vector<1x32xf32> to vector<8x32xf32>
    %10 = arith.addf %8, %9 : vector<8x32xf32>
    %cst_10 = arith.constant 0.000000e+00 : f32
    %11 = vector.broadcast %cst_10 : f32 to vector<8x32xf32>
    %12 = arith.maximumf %10, %11 : vector<8x32xf32>
    %cst_11 = arith.constant dense<0.000000e+00> : vector<8xf32>
    %13 = vector.multi_reduction <add>, %12, %cst_11 [1] : vector<8x32xf32> to vector<8xf32>
    %14 = vector.shape_cast %13 : vector<8xf32> to vector<8x1xf32>
    %cst_12 = arith.constant 3.200000e+01 : f32
    %15 = vector.broadcast %cst_12 : f32 to vector<8x1xf32>
    %16 = arith.divf %14, %15 : vector<8x1xf32>
    %17 = vector.broadcast %16 : vector<8x1xf32> to vector<8x32xf32>
    %18 = arith.subf %12, %17 : vector<8x32xf32>
    %19 = vector.broadcast %16 : vector<8x1xf32> to vector<8x32xf32>
    %20 = arith.subf %12, %19 : vector<8x32xf32>
    %21 = arith.mulf %18, %20 : vector<8x32xf32>
    %cst_13 = arith.constant dense<0.000000e+00> : vector<8xf32>
    %22 = vector.multi_reduction <add>, %21, %cst_13 [1] : vector<8x32xf32> to vector<8xf32>
    %23 = vector.shape_cast %22 : vector<8xf32> to vector<8x1xf32>
    %cst_14 = arith.constant 3.200000e+01 : f32
    %24 = vector.broadcast %cst_14 : f32 to vector<8x1xf32>
    %25 = arith.divf %23, %24 : vector<8x1xf32>
    %26 = vector.broadcast %16 : vector<8x1xf32> to vector<8x32xf32>
    %27 = arith.subf %12, %26 : vector<8x32xf32>
    %cst_15 = arith.constant 9.99999974E-6 : f32
    %28 = vector.broadcast %cst_15 : f32 to vector<8x1xf32>
    %29 = arith.addf %25, %28 : vector<8x1xf32>
    %30 = math.rsqrt %29 : vector<8x1xf32>
    %31 = vector.broadcast %30 : vector<8x1xf32> to vector<8x32xf32>
    %32 = arith.mulf %27, %31 : vector<8x32xf32>
    %33 = vector.broadcast %2 : vector<1x32xf32> to vector<8x32xf32>
    %34 = arith.mulf %32, %33 : vector<8x32xf32>
    %35 = vector.broadcast %3 : vector<1x32xf32> to vector<8x32xf32>
    %36 = arith.addf %34, %35 : vector<8x32xf32>
    %37 = arith.addf %4, %36 : vector<8x32xf32>
    %c1_i32 = arith.constant 1 : i32
    %38 = arith.index_cast %c1_i32 : i32 to index
    %c0_16 = arith.constant 0 : index
    %c0_17 = arith.constant 0 : index
    %39 = vector.load %arg1[%38, %c0_16, %c0_17] : memref<4x8x16xbf16, #tpu.memory_space<vmem>>, vector<1x8x16xbf16>
    %40 = vector.shape_cast %39 : vector<1x8x16xbf16> to vector<8x16xbf16>
    %cst_18 = arith.constant dense<0.000000e+00> : vector<8x32xf32>
    %41 = tpu.matmul %40, %0, %cst_18 {dimension_numbers = #tpu.dot_dimension_numbers<[1], [0], [0], [1], [0, 0, 1, 1], [], []>} : vector<8x16xbf16>, vector<16x32xbf16>, vector<8x32xf32> -> vector<8x32xf32>
    %42 = vector.broadcast %1 : vector<1x32xf32> to vector<8x32xf32>
    %43 = arith.addf %41, %42 : vector<8x32xf32>
    %cst_19 = arith.constant 0.000000e+00 : f32
    %44 = vector.broadcast %cst_19 : f32 to vector<8x32xf32>
    %45 = arith.maximumf %43, %44 : vector<8x32xf32>
    %cst_20 = arith.constant dense<0.000000e+00> : vector<8xf32>
    %46 = vector.multi_reduction <add>, %45, %cst_20 [1] : vector<8x32xf32> to vector<8xf32>
    %47 = vector.shape_cast %46 : vector<8xf32> to vector<8x1xf32>
    %cst_21 = arith.constant 3.200000e+01 : f32
    %48 = vector.broadcast %cst_21 : f32 to vector<8x1xf32>
    %49 = arith.divf %47, %48 : vector<8x1xf32>
    %50 = vector.broadcast %49 : vector<8x1xf32> to vector<8x32xf32>
    %51 = arith.subf %45, %50 : vector<8x32xf32>
    %52 = vector.broadcast %49 : vector<8x1xf32> to vector<8x32xf32>
    %53 = arith.subf %45, %52 : vector<8x32xf32>
    %54 = arith.mulf %51, %53 : vector<8x32xf32>
    %cst_22 = arith.constant dense<0.000000e+00> : vector<8xf32>
    %55 = vector.multi_reduction <add>, %54, %cst_22 [1] : vector<8x32xf32> to vector<8xf32>
    %56 = vector.shape_cast %55 : vector<8xf32> to vector<8x1xf32>
    %cst_23 = arith.constant 3.200000e+01 : f32
    %57 = vector.broadcast %cst_23 : f32 to vector<8x1xf32>
    %58 = arith.divf %56, %57 : vector<8x1xf32>
    %59 = vector.broadcast %49 : vector<8x1xf32> to vector<8x32xf32>
    %60 = arith.subf %45, %59 : vector<8x32xf32>
    %cst_24 = arith.constant 9.99999974E-6 : f32
    %61 = vector.broadcast %cst_24 : f32 to vector<8x1xf32>
    %62 = arith.addf %58, %61 : vector<8x1xf32>
    %63 = math.rsqrt %62 : vector<8x1xf32>
    %64 = vector.broadcast %63 : vector<8x1xf32> to vector<8x32xf32>
    %65 = arith.mulf %60, %64 : vector<8x32xf32>
    %66 = vector.broadcast %2 : vector<1x32xf32> to vector<8x32xf32>
    %67 = arith.mulf %65, %66 : vector<8x32xf32>
    %68 = vector.broadcast %3 : vector<1x32xf32> to vector<8x32xf32>
    %69 = arith.addf %67, %68 : vector<8x32xf32>
    %70 = arith.addf %37, %69 : vector<8x32xf32>
    %c2_i32 = arith.constant 2 : i32
    %71 = arith.index_cast %c2_i32 : i32 to index
    %c0_25 = arith.constant 0 : index
    %c0_26 = arith.constant 0 : index
    %72 = vector.load %arg1[%71, %c0_25, %c0_26] : memref<4x8x16xbf16, #tpu.memory_space<vmem>>, vector<1x8x16xbf16>
    %73 = vector.shape_cast %72 : vector<1x8x16xbf16> to vector<8x16xbf16>
    %cst_27 = arith.constant dense<0.000000e+00> : vector<8x32xf32>
    %74 = tpu.matmul %73, %0, %cst_27 {dimension_numbers = #tpu.dot_dimension_numbers<[1], [0], [0], [1], [0, 0, 1, 1], [], []>} : vector<8x16xbf16>, vector<16x32xbf16>, vector<8x32xf32> -> vector<8x32xf32>
    %75 = vector.broadcast %1 : vector<1x32xf32> to vector<8x32xf32>
    %76 = arith.addf %74, %75 : vector<8x32xf32>
    %cst_28 = arith.constant 0.000000e+00 : f32
    %77 = vector.broadcast %cst_28 : f32 to vector<8x32xf32>
    %78 = arith.maximumf %76, %77 : vector<8x32xf32>
    %cst_29 = arith.constant dense<0.000000e+00> : vector<8xf32>
    %79 = vector.multi_reduction <add>, %78, %cst_29 [1] : vector<8x32xf32> to vector<8xf32>
    %80 = vector.shape_cast %79 : vector<8xf32> to vector<8x1xf32>
    %cst_30 = arith.constant 3.200000e+01 : f32
    %81 = vector.broadcast %cst_30 : f32 to vector<8x1xf32>
    %82 = arith.divf %80, %81 : vector<8x1xf32>
    %83 = vector.broadcast %82 : vector<8x1xf32> to vector<8x32xf32>
    %84 = arith.subf %78, %83 : vector<8x32xf32>
    %85 = vector.broadcast %82 : vector<8x1xf32> to vector<8x32xf32>
    %86 = arith.subf %78, %85 : vector<8x32xf32>
    %87 = arith.mulf %84, %86 : vector<8x32xf32>
    %cst_31 = arith.constant dense<0.000000e+00> : vector<8xf32>
    %88 = vector.multi_reduction <add>, %87, %cst_31 [1] : vector<8x32xf32> to vector<8xf32>
    %89 = vector.shape_cast %88 : vector<8xf32> to vector<8x1xf32>
    %cst_32 = arith.constant 3.200000e+01 : f32
    %90 = vector.broadcast %cst_32 : f32 to vector<8x1xf32>
    %91 = arith.divf %89, %90 : vector<8x1xf32>
    %92 = vector.broadcast %82 : vector<8x1xf32> to vector<8x32xf32>
    %93 = arith.subf %78, %92 : vector<8x32xf32>
    %cst_33 = arith.constant 9.99999974E-6 : f32
    %94 = vector.broadcast %cst_33 : f32 to vector<8x1xf32>
    %95 = arith.addf %91, %94 : vector<8x1xf32>
    %96 = math.rsqrt %95 : vector<8x1xf32>
    %97 = vector.broadcast %96 : vector<8x1xf32> to vector<8x32xf32>
    %98 = arith.mulf %93, %97 : vector<8x32xf32>
    %99 = vector.broadcast %2 : vector<1x32xf32> to vector<8x32xf32>
    %100 = arith.mulf %98, %99 : vector<8x32xf32>
    %101 = vector.broadcast %3 : vector<1x32xf32> to vector<8x32xf32>
    %102 = arith.addf %100, %101 : vector<8x32xf32>
    %103 = arith.addf %70, %102 : vector<8x32xf32>
    %c3_i32 = arith.constant 3 : i32
    %104 = arith.index_cast %c3_i32 : i32 to index
    %c0_34 = arith.constant 0 : index
    %c0_35 = arith.constant 0 : index
    %105 = vector.load %arg1[%104, %c0_34, %c0_35] : memref<4x8x16xbf16, #tpu.memory_space<vmem>>, vector<1x8x16xbf16>
    %106 = vector.shape_cast %105 : vector<1x8x16xbf16> to vector<8x16xbf16>
    %cst_36 = arith.constant dense<0.000000e+00> : vector<8x32xf32>
    %107 = tpu.matmul %106, %0, %cst_36 {dimension_numbers = #tpu.dot_dimension_numbers<[1], [0], [0], [1], [0, 0, 1, 1], [], []>} : vector<8x16xbf16>, vector<16x32xbf16>, vector<8x32xf32> -> vector<8x32xf32>
    %108 = vector.broadcast %1 : vector<1x32xf32> to vector<8x32xf32>
    %109 = arith.addf %107, %108 : vector<8x32xf32>
    %cst_37 = arith.constant 0.000000e+00 : f32
    %110 = vector.broadcast %cst_37 : f32 to vector<8x32xf32>
    %111 = arith.maximumf %109, %110 : vector<8x32xf32>
    %cst_38 = arith.constant dense<0.000000e+00> : vector<8xf32>
    %112 = vector.multi_reduction <add>, %111, %cst_38 [1] : vector<8x32xf32> to vector<8xf32>
    %113 = vector.shape_cast %112 : vector<8xf32> to vector<8x1xf32>
    %cst_39 = arith.constant 3.200000e+01 : f32
    %114 = vector.broadcast %cst_39 : f32 to vector<8x1xf32>
    %115 = arith.divf %113, %114 : vector<8x1xf32>
    %116 = vector.broadcast %115 : vector<8x1xf32> to vector<8x32xf32>
    %117 = arith.subf %111, %116 : vector<8x32xf32>
    %118 = vector.broadcast %115 : vector<8x1xf32> to vector<8x32xf32>
    %119 = arith.subf %111, %118 : vector<8x32xf32>
    %120 = arith.mulf %117, %119 : vector<8x32xf32>
    %cst_40 = arith.constant dense<0.000000e+00> : vector<8xf32>
    %121 = vector.multi_reduction <add>, %120, %cst_40 [1] : vector<8x32xf32> to vector<8xf32>
    %122 = vector.shape_cast %121 : vector<8xf32> to vector<8x1xf32>
    %cst_41 = arith.constant 3.200000e+01 : f32
    %123 = vector.broadcast %cst_41 : f32 to vector<8x1xf32>
    %124 = arith.divf %122, %123 : vector<8x1xf32>
    %125 = vector.broadcast %115 : vector<8x1xf32> to vector<8x32xf32>
    %126 = arith.subf %111, %125 : vector<8x32xf32>
    %cst_42 = arith.constant 9.99999974E-6 : f32
    %127 = vector.broadcast %cst_42 : f32 to vector<8x1xf32>
    %128 = arith.addf %124, %127 : vector<8x1xf32>
    %129 = math.rsqrt %128 : vector<8x1xf32>
    %130 = vector.broadcast %129 : vector<8x1xf32> to vector<8x32xf32>
    %131 = arith.mulf %126, %130 : vector<8x32xf32>
    %132 = vector.broadcast %2 : vector<1x32xf32> to vector<8x32xf32>
    %133 = arith.mulf %131, %132 : vector<8x32xf32>
    %134 = vector.broadcast %3 : vector<1x32xf32> to vector<8x32xf32>
    %135 = arith.addf %133, %134 : vector<8x32xf32>
    %136 = arith.addf %103, %135 : vector<8x32xf32>
    %c4_i32 = arith.constant 4 : i32
    %cst_43 = arith.constant 2.500000e-01 : f32
    %137 = vector.broadcast %cst_43 : f32 to vector<8x32xf32>
    %138 = arith.mulf %136, %137 : vector<8x32xf32>
    %139 = arith.truncf %138 : vector<8x32xf32> to vector<8x32xbf16>
    %c0_44 = arith.constant 0 : index
    %c0_45 = arith.constant 0 : index
    %140 = vector.load %arg6[%c0_44, %c0_45] : memref<32x128xbf16, #tpu.memory_space<vmem>>, vector<32x128xbf16>
    %cst_46 = arith.constant dense<0.000000e+00> : vector<8x128xf32>
    %141 = tpu.matmul %139, %140, %cst_46 {dimension_numbers = #tpu.dot_dimension_numbers<[1], [0], [0], [1], [0, 0, 1, 1], [], []>} : vector<8x32xbf16>, vector<32x128xbf16>, vector<8x128xf32> -> vector<8x128xf32>
    %c0_47 = arith.constant 0 : index
    %c0_48 = arith.constant 0 : index
    %142 = vector.load %arg7[%c0_47, %c0_48] : memref<1x128xf32, #tpu.memory_space<vmem>>, vector<1x128xf32>
    %143 = vector.broadcast %142 : vector<1x128xf32> to vector<8x128xf32>
    %144 = arith.addf %141, %143 : vector<8x128xf32>
    %c0_49 = arith.constant 0 : index
    %c0_50 = arith.constant 0 : index
    %145 = vector.load %arg15[%c0_49, %c0_50] : memref<8x128xf32, #tpu.memory_space<vmem>>, vector<8x128xf32>
    tpu.vector_store %arg15[%c0_49, %c0_50], %144 {strides = array<i32>} : memref<8x128xf32, #tpu.memory_space<vmem>>, vector<8x128xf32>,
    %146 = arith.truncf %144 : vector<8x128xf32> to vector<8x128xbf16>
    %c0_51 = arith.constant 0 : index
    %c0_52 = arith.constant 0 : index
    %147 = vector.load %arg8[%c0_51, %c0_52] : memref<128x32xbf16, #tpu.memory_space<vmem>>, vector<128x32xbf16>
    %cst_53 = arith.constant dense<0.000000e+00> : vector<8x32xf32>
    %148 = tpu.matmul %146, %147, %cst_53 {dimension_numbers = #tpu.dot_dimension_numbers<[1], [0], [0], [1], [0, 0, 1, 1], [], []>} : vector<8x128xbf16>, vector<128x32xbf16>, vector<8x32xf32> -> vector<8x32xf32>
    %c0_54 = arith.constant 0 : index
    %c0_55 = arith.constant 0 : index
    %149 = vector.load %arg9[%c0_54, %c0_55] : memref<1x32xf32, #tpu.memory_space<vmem>>, vector<1x32xf32>
    %150 = vector.broadcast %149 : vector<1x32xf32> to vector<8x32xf32>
    %151 = arith.addf %148, %150 : vector<8x32xf32>
    %cst_56 = arith.constant 0.000000e+00 : f32
    %152 = vector.broadcast %cst_56 : f32 to vector<8x32xf32>
    %153 = arith.maximumf %151, %152 : vector<8x32xf32>
    %c0_57 = arith.constant 0 : index
    %c0_58 = arith.constant 0 : index
    %154 = vector.load %arg10[%c0_57, %c0_58] : memref<1x32xf32, #tpu.memory_space<vmem>>, vector<1x32xf32>
    %c0_59 = arith.constant 0 : index
    %c0_60 = arith.constant 0 : index
    %155 = vector.load %arg11[%c0_59, %c0_60] : memref<1x32xf32, #tpu.memory_space<vmem>>, vector<1x32xf32>
    %cst_61 = arith.constant dense<0.000000e+00> : vector<8xf32>
    %156 = vector.multi_reduction <add>, %153, %cst_61 [1] : vector<8x32xf32> to vector<8xf32>
    %157 = vector.shape_cast %156 : vector<8xf32> to vector<8x1xf32>
    %cst_62 = arith.constant 3.200000e+01 : f32
    %158 = vector.broadcast %cst_62 : f32 to vector<8x1xf32>
    %159 = arith.divf %157, %158 : vector<8x1xf32>
    %160 = vector.broadcast %159 : vector<8x1xf32> to vector<8x32xf32>
    %161 = arith.subf %153, %160 : vector<8x32xf32>
    %162 = vector.broadcast %159 : vector<8x1xf32> to vector<8x32xf32>
    %163 = arith.subf %153, %162 : vector<8x32xf32>
    %164 = arith.mulf %161, %163 : vector<8x32xf32>
    %cst_63 = arith.constant dense<0.000000e+00> : vector<8xf32>
    %165 = vector.multi_reduction <add>, %164, %cst_63 [1] : vector<8x32xf32> to vector<8xf32>
    %166 = vector.shape_cast %165 : vector<8xf32> to vector<8x1xf32>
    %cst_64 = arith.constant 3.200000e+01 : f32
    %167 = vector.broadcast %cst_64 : f32 to vector<8x1xf32>
    %168 = arith.divf %166, %167 : vector<8x1xf32>
    %169 = vector.broadcast %159 : vector<8x1xf32> to vector<8x32xf32>
    %170 = arith.subf %153, %169 : vector<8x32xf32>
    %cst_65 = arith.constant 9.99999974E-6 : f32
    %171 = vector.broadcast %cst_65 : f32 to vector<8x1xf32>
    %172 = arith.addf %168, %171 : vector<8x1xf32>
    %173 = math.rsqrt %172 : vector<8x1xf32>
    %174 = vector.broadcast %173 : vector<8x1xf32> to vector<8x32xf32>
    %175 = arith.mulf %170, %174 : vector<8x32xf32>
    %176 = vector.broadcast %154 : vector<1x32xf32> to vector<8x32xf32>
    %177 = arith.mulf %175, %176 : vector<8x32xf32>
    %178 = vector.broadcast %155 : vector<1x32xf32> to vector<8x32xf32>
    %179 = arith.addf %177, %178 : vector<8x32xf32>
    %180 = arith.truncf %179 : vector<8x32xf32> to vector<8x32xbf16>
    %c0_66 = arith.constant 0 : index
    %c0_67 = arith.constant 0 : index
    %181 = vector.load %arg12[%c0_66, %c0_67] : memref<32x128xbf16, #tpu.memory_space<vmem>>, vector<32x128xbf16>
    %cst_68 = arith.constant dense<0.000000e+00> : vector<8x128xf32>
    %182 = tpu.matmul %180, %181, %cst_68 {dimension_numbers = #tpu.dot_dimension_numbers<[1], [0], [0], [1], [0, 0, 1, 1], [], []>} : vector<8x32xbf16>, vector<32x128xbf16>, vector<8x128xf32> -> vector<8x128xf32>
    %c0_69 = arith.constant 0 : index
    %c0_70 = arith.constant 0 : index
    %183 = vector.load %arg13[%c0_69, %c0_70] : memref<1x128xf32, #tpu.memory_space<vmem>>, vector<1x128xf32>
    %184 = vector.broadcast %183 : vector<1x128xf32> to vector<8x128xf32>
    %185 = arith.addf %182, %184 : vector<8x128xf32>
    %c0_71 = arith.constant 0 : index
    %c0_72 = arith.constant 0 : index
    %186 = vector.load %arg14[%c0_71, %c0_72] : memref<8x128xf32, #tpu.memory_space<vmem>>, vector<8x128xf32>
    tpu.vector_store %arg14[%c0_71, %c0_72], %185 {strides = array<i32>} : memref<8x128xf32, #tpu.memory_space<vmem>>, vector<8x128xf32>,
    return
  }
  func.func @transform_0(%arg0: i32) -> (i32, i32, i32) {
    %c0_i32 = arith.constant 0 : i32
    %c0_i32_0 = arith.constant 0 : i32
    %c0_i32_1 = arith.constant 0 : i32
    return %c0_i32, %arg0, %c0_i32_0 : i32, i32, i32
  }
  func.func @transform_1(%arg0: i32) -> (i32, i32) {
    %c0_i32 = arith.constant 0 : i32
    %c0_i32_0 = arith.constant 0 : i32
    %c0_i32_1 = arith.constant 0 : i32
    return %c0_i32, %c0_i32_0 : i32, i32
  }
  func.func @transform_2(%arg0: i32) -> (i32, i32) {
    %c0_i32 = arith.constant 0 : i32
    %c0_i32_0 = arith.constant 0 : i32
    %c0_i32_1 = arith.constant 0 : i32
    return %c0_i32, %c0_i32_0 : i32, i32
  }
  func.func @transform_3(%arg0: i32) -> (i32, i32) {
    %c0_i32 = arith.constant 0 : i32
    %c0_i32_0 = arith.constant 0 : i32
    %c0_i32_1 = arith.constant 0 : i32
    return %c0_i32, %c0_i32_0 : i32, i32
  }
  func.func @transform_4(%arg0: i32) -> (i32, i32) {
    %c0_i32 = arith.constant 0 : i32
    %c0_i32_0 = arith.constant 0 : i32
    %c0_i32_1 = arith.constant 0 : i32
    return %c0_i32, %c0_i32_0 : i32, i32
  }
  func.func @transform_5(%arg0: i32) -> (i32, i32) {
    %c0_i32 = arith.constant 0 : i32
    %c0_i32_0 = arith.constant 0 : i32
    %c0_i32_1 = arith.constant 0 : i32
    return %c0_i32, %c0_i32_0 : i32, i32
  }
  func.func @transform_6(%arg0: i32) -> (i32, i32) {
    %c0_i32 = arith.constant 0 : i32
    %c0_i32_0 = arith.constant 0 : i32
    %c0_i32_1 = arith.constant 0 : i32
    return %c0_i32, %c0_i32_0 : i32, i32
  }
  func.func @transform_7(%arg0: i32) -> (i32, i32) {
    %c0_i32 = arith.constant 0 : i32
    %c0_i32_0 = arith.constant 0 : i32
    %c0_i32_1 = arith.constant 0 : i32
    return %c0_i32, %c0_i32_0 : i32, i32
  }
  func.func @transform_8(%arg0: i32) -> (i32, i32) {
    %c0_i32 = arith.constant 0 : i32
    %c0_i32_0 = arith.constant 0 : i32
    %c0_i32_1 = arith.constant 0 : i32
    return %c0_i32, %c0_i32_0 : i32, i32
  }
  func.func @transform_9(%arg0: i32) -> (i32, i32) {
    %c0_i32 = arith.constant 0 : i32
    %c0_i32_0 = arith.constant 0 : i32
    %c0_i32_1 = arith.constant 0 : i32
    return %c0_i32, %c0_i32_0 : i32, i32
  }
  func.func @transform_10(%arg0: i32) -> (i32, i32) {
    %c0_i32 = arith.constant 0 : i32
    %c0_i32_0 = arith.constant 0 : i32
    %c0_i32_1 = arith.constant 0 : i32
    return %c0_i32, %c0_i32_0 : i32, i32
  }
  func.func @transform_11(%arg0: i32) -> (i32, i32) {
    %c0_i32 = arith.constant 0 : i32
    %c0_i32_0 = arith.constant 0 : i32
    %c0_i32_1 = arith.constant 0 : i32
    return %c0_i32, %c0_i32_0 : i32, i32
  }
  func.func @transform_12(%arg0: i32) -> (i32, i32) {
    %c0_i32 = arith.constant 0 : i32
    %c0_i32_0 = arith.constant 0 : i32
    %c0_i32_1 = arith.constant 0 : i32
    return %c0_i32, %c0_i32_0 : i32, i32
  }
  func.func @transform_13(%arg0: i32) -> (i32, i32) {
    %c0_i32 = arith.constant 0 : i32
    %c0_i32_0 = arith.constant 0 : i32
    return %arg0, %c0_i32 : i32, i32
  }
  func.func @transform_14(%arg0: i32) -> (i32, i32) {
    %c0_i32 = arith.constant 0 : i32
    %c0_i32_0 = arith.constant 0 : i32
    return %arg0, %c0_i32 : i32, i32
  }
}

</mosaic_0001>

<llo_original>
// kernel: tpu_custom_call.1
$region0: #{tpu_custom_call.1}
  #allocation0 [shape = 'u32[]', space=smem, size = 0x4, offset = 0x4, fixed_abs, tag = 'smem constant byte address 0x4 - core index']
  #allocation1 [shape = 'u32[144,128]{1,0:T(1,128)}', space=vmem, size = 0x12000, scoped, tag = 'internal scratch']
  %s0 = inlined_call_operand.vmem [shape: bf16[4,8,16], index: 0, kind: input, shape index: {}]
  %s1 = inlined_call_operand.vmem [shape: bf16[16,32], index: 1, kind: input, shape index: {}]
  %s2 = inlined_call_operand.vmem [shape: f32[1,32], index: 2, kind: input, shape index: {}]
  %s3 = inlined_call_operand.vmem [shape: f32[1,32], index: 3, kind: input, shape index: {}]
  %s4 = inlined_call_operand.vmem [shape: f32[1,32], index: 4, kind: input, shape index: {}]
  %s5 = inlined_call_operand.vmem [shape: bf16[32,128], index: 5, kind: input, shape index: {}]
  %s6 = inlined_call_operand.vmem [shape: f32[1,128], index: 6, kind: input, shape index: {}]
  %s7 = inlined_call_operand.vmem [shape: bf16[128,32], index: 7, kind: input, shape index: {}]
  %s8 = inlined_call_operand.vmem [shape: f32[1,32], index: 8, kind: input, shape index: {}]
  %s9 = inlined_call_operand.vmem [shape: f32[1,32], index: 9, kind: input, shape index: {}]
  %s10 = inlined_call_operand.vmem [shape: f32[1,32], index: 10, kind: input, shape index: {}]
  %s11 = inlined_call_operand.vmem [shape: bf16[32,128], index: 11, kind: input, shape index: {}]
  %s12 = inlined_call_operand.vmem [shape: f32[1,128], index: 12, kind: input, shape index: {}]
  %s13 = inlined_call_operand.hbm [shape: f32[8,128], index: 13, kind: output, shape index: {0}]
  %s14 = inlined_call_operand.hbm [shape: f32[8,128], index: 14, kind: output, shape index: {1}]
  %15 = xla_tuple %s13, %s14
  %s16 = sld [smem:[#allocation0]]
  $region70: #{tpu_custom_call.1} parent=0
    _
  %s18 = ssub.s32 1, %s16
  %s19 = scalar_select 0, %s18, %s16
  $region1: #{tpu_custom_call.1} parent=0
    #allocation2 [shape = 'u8[4096]{0}', space=vmem, size = 0x1000, scoped, tag = 'output window, operand 0, single buffered']
    #allocation3 [shape = 's32[1]{0}', space=sflag, size = 0x4, scoped, tag = 'scoped memory for tpu_custom_call.1']
    #allocation4 [shape = 'u8[4096]{0}', space=vmem, size = 0x1000, scoped, tag = 'output window, operand 1, single buffered']
    #allocation5 [shape = 's32[1]{0}', space=sflag, size = 0x4, scoped, tag = 'scoped memory for tpu_custom_call.1']
    %20 = vsyncpa [#allocation3], 0
    %21 = vsyncpa [#allocation5], 0
    // Predicated region
    $region2: #{tpu_custom_call.1} parent=1 // pred_check
      _
    $region3: #{tpu_custom_call.1} parent=1 // pred_check_branch
      %23 = sbr.rel (0) target = $region5
    $region4: #{tpu_custom_call.1} parent=1 // pred_region
      _
    $region5: #{tpu_custom_call.1} parent=1 // pred_fallthru
      _
    // Predicated region
    $region6: #{tpu_custom_call.1} parent=1 // pred_check
      _
    $region7: #{tpu_custom_call.1} parent=1 // pred_check_branch
      %25 = sbr.rel (0) target = $region9
    $region8: #{tpu_custom_call.1} parent=1 // pred_region
      _
    $region9: #{tpu_custom_call.1} parent=1 // pred_fallthru
      _
    // Predicated region
    $region10: #{tpu_custom_call.1} parent=1 // pred_check
      _
    $region11: #{tpu_custom_call.1} parent=1 // pred_check_branch
      %27 = sbr.rel (0) target = $region13
    $region12: #{tpu_custom_call.1} parent=1 // pred_region
      _
    $region13: #{tpu_custom_call.1} parent=1 // pred_fallthru
      _
    // Predicated region
    $region14: #{tpu_custom_call.1} parent=1 // pred_check
      _
    $region15: #{tpu_custom_call.1} parent=1 // pred_check_branch
      %29 = sbr.rel (0) target = $region17
    $region16: #{tpu_custom_call.1} parent=1 // pred_region
      _
    $region17: #{tpu_custom_call.1} parent=1 // pred_fallthru
      _
    // Predicated region
    $region18: #{tpu_custom_call.1} parent=1 // pred_check
      _
    $region19: #{tpu_custom_call.1} parent=1 // pred_check_branch
      %31 = sbr.rel (0) target = $region21
    $region20: #{tpu_custom_call.1} parent=1 // pred_region
      _
    $region21: #{tpu_custom_call.1} parent=1 // pred_fallthru
      _
    // Predicated region
    $region22: #{tpu_custom_call.1} parent=1 // pred_check
      _
    $region23: #{tpu_custom_call.1} parent=1 // pred_check_branch
      %33 = sbr.rel (0) target = $region25
    $region24: #{tpu_custom_call.1} parent=1 // pred_region
      _
    $region25: #{tpu_custom_call.1} parent=1 // pred_fallthru
      _
    // Predicated region
    $region26: #{tpu_custom_call.1} parent=1 // pred_check
      _
    $region27: #{tpu_custom_call.1} parent=1 // pred_check_branch
      %35 = sbr.rel (0) target = $region29
    $region28: #{tpu_custom_call.1} parent=1 // pred_region
      _
    $region29: #{tpu_custom_call.1} parent=1 // pred_fallthru
      _
    // Predicated region
    $region30: #{tpu_custom_call.1} parent=1 // pred_check
      _
    $region31: #{tpu_custom_call.1} parent=1 // pred_check_branch
      %37 = sbr.rel (0) target = $region33
    $region32: #{tpu_custom_call.1} parent=1 // pred_region
      _
    $region33: #{tpu_custom_call.1} parent=1 // pred_fallthru
      _
    // Predicated region
    $region34: #{tpu_custom_call.1} parent=1 // pred_check
      _
    $region35: #{tpu_custom_call.1} parent=1 // pred_check_branch
      %39 = sbr.rel (0) target = $region37
    $region36: #{tpu_custom_call.1} parent=1 // pred_region
      _
    $region37: #{tpu_custom_call.1} parent=1 // pred_fallthru
      _
    // Predicated region
    $region38: #{tpu_custom_call.1} parent=1 // pred_check
      _
    $region39: #{tpu_custom_call.1} parent=1 // pred_check_branch
      %41 = sbr.rel (0) target = $region41
    $region40: #{tpu_custom_call.1} parent=1 // pred_region
      _
    $region41: #{tpu_custom_call.1} parent=1 // pred_fallthru
      _
    // Predicated region
    $region42: #{tpu_custom_call.1} parent=1 // pred_check
      _
    $region43: #{tpu_custom_call.1} parent=1 // pred_check_branch
      %43 = sbr.rel (0) target = $region45
    $region44: #{tpu_custom_call.1} parent=1 // pred_region
      _
    $region45: #{tpu_custom_call.1} parent=1 // pred_fallthru
      _
    // Predicated region
    $region46: #{tpu_custom_call.1} parent=1 // pred_check
      _
    $region47: #{tpu_custom_call.1} parent=1 // pred_check_branch
      %45 = sbr.rel (0) target = $region49
    $region48: #{tpu_custom_call.1} parent=1 // pred_region
      _
    $region49: #{tpu_custom_call.1} parent=1 // pred_fallthru
      _
    // Predicated region
    $region50: #{tpu_custom_call.1} parent=1 // pred_check
      _
    $region51: #{tpu_custom_call.1} parent=1 // pred_check_branch
      %47 = sbr.rel (0) target = $region53
    $region52: #{tpu_custom_call.1} parent=1 // pred_region
      _
    $region53: #{tpu_custom_call.1} parent=1 // pred_fallthru
      _
    %v49 = vld [vmem:[%s1] sm:$0xf]
    %v50 = vld [vmem:[%s1 + $0x4] sm:$0xf]
    %v51 = vld [vmem:[%s2] sm:$0x1]
    %v52 = vld [vmem:[%s3] sm:$0x1]
    %v53 = vld [vmem:[%s4] sm:$0x1]
    %v54 = vld [vmem:[%s0] sm:$0xf]
    %v56 = vlaneseq
    %v57 = vshrl.u32 %v56, 7
    %v58 = vsub.s32 0, %v57
    %v59 = vrot.slane %v51, %v58
    %v63 = vunpack.c.l.b16 %v49
    %v64 = vunpack.c.l.b16 %v50
    %v65 = vpack.c.b16 %v64, %v63
    %vm67 = vcmask 130048
    %v69 = vsel %vm67, %v54, 0
    %71 = vmatprep.subr.bf16.mxu0 0
    %72 = vmatpush1.bf16.msra.mxu0 %v65
    %73 = vmatprep.subr.bf16.mxu0 0
    %74 = vmatpush1.bf16.msra.mxu0 0
    %75 = vmatprep.subr.bf16.mxu0 0
    %76 = vmatpush1.bf16.msra.mxu0 0
    %77 = vmatprep.subr.bf16.mxu0 0
    %78 = vmatpush1.bf16.msra.mxu0 0
    %79 = vmatprep.subr.bf16.mxu0 0
    %80 = vmatpush1.bf16.msra.mxu0 0
    %81 = vmatprep.subr.bf16.mxu0 0
    %82 = vmatpush1.bf16.msra.mxu0 0
    %83 = vmatprep.subr.bf16.mxu0 0
    %84 = vmatpush1.bf16.msra.mxu0 0
    %85 = vmatprep.subr.bf16.mxu0 0
    %86 = vmatpush1.bf16.msra.mxu0 0
    %87 = vmatprep.subr.bf16.mxu0 0
    %88 = vmatpush1.bf16.msra.mxu0 0
    %89 = vmatprep.subr.bf16.mxu0 0
    %90 = vmatpush1.bf16.msra.mxu0 0
    %91 = vmatprep.subr.bf16.mxu0 0
    %92 = vmatpush1.bf16.msra.mxu0 0
    %93 = vmatprep.subr.bf16.mxu0 0
    %94 = vmatpush1.bf16.msra.mxu0 0
    %95 = vmatprep.subr.bf16.mxu0 0
    %96 = vmatpush1.bf16.msra.mxu0 0
    %97 = vmatprep.subr.bf16.mxu0 0
    %98 = vmatpush1.bf16.msra.mxu0 0
    %99 = vmatprep.subr.bf16.mxu0 0
    %100 = vmatpush1.bf16.msra.mxu0 0
    %101 = vmatprep.subr.bf16.mxu0 0
    %102 = vmatpush1.bf16.msra.mxu0 0
    %103 = vmatprep.mubr.bf16.mxu0 0
    %104 = vmatmul.mubr.bf16.gmra.mrb[0].mxu0 %v69
    %v105 = vpop.f32.mrb[0].mxu0
    %v106 = vadd.f32 %v59, %v105
    %v107 = vpop.f32.mrb[0].mxu0
    %v108 = vpop.f32.mrb[0].mxu0
    %v109 = vpop.f32.mrb[0].mxu0
    %110 = vdwg.mxu0
    %v111 = vmax.f32 %v106, 0.0
    %vm112 = vcmask 261120
    %v113 = vsel %vm112, %v111, 0.0
    %114 = vadd.xlane.f32.xlu0 %v113
    %v115 = vpop.xlane.xlu0 %114
    %v116 = vrcp.pop 32.0
    %v117 = vmul.f32 %v115, %v116
    %v118 = vsub.f32 %v111, %v117
    %v119 = vmul.f32 %v118, %v118
    %v120 = vsel %vm112, %v119, 0.0
    %121 = vadd.xlane.f32.xlu0 %v120
    %v122 = vpop.xlane.xlu0 %121
    %v123 = vmul.f32 %v122, %v116
    %v124 = vadd.f32 %v123, 1e-05
    %v125 = vrsqrt.pop %v124
    %v126 = vmul.f32 %v118, %v125
    %v128 = vlaneseq
    %v129 = vshrl.u32 %v128, 7
    %v130 = vsub.s32 0, %v129
    %v131 = vrot.slane %v52, %v130
    %v133 = vmul.f32 %v126, %v131
    %v135 = vlaneseq
    %v136 = vshrl.u32 %v135, 7
    %v137 = vsub.s32 0, %v136
    %v138 = vrot.slane %v53, %v137
    %v140 = vadd.f32 %v133, %v138
    %v141 = vadd.f32 %v140, 0.0
    %s142 = scalar_lea.vmem %s0, 4
    %v143 = vld [vmem:[%s142] sm:$0xf]
    %v145 = vsel %vm67, %v143, 0
    %147 = vmatprep.subr.bf16.mxu0 0
    %148 = vmatpush1.bf16.msra.mxu0 %v65
    %149 = vmatprep.subr.bf16.mxu0 0
    %150 = vmatpush1.bf16.msra.mxu0 0
    %151 = vmatprep.subr.bf16.mxu0 0
    %152 = vmatpush1.bf16.msra.mxu0 0
    %153 = vmatprep.subr.bf16.mxu0 0
    %154 = vmatpush1.bf16.msra.mxu0 0
    %155 = vmatprep.subr.bf16.mxu0 0
    %156 = vmatpush1.bf16.msra.mxu0 0
    %157 = vmatprep.subr.bf16.mxu0 0
    %158 = vmatpush1.bf16.msra.mxu0 0
    %159 = vmatprep.subr.bf16.mxu0 0
    %160 = vmatpush1.bf16.msra.mxu0 0
    %161 = vmatprep.subr.bf16.mxu0 0
    %162 = vmatpush1.bf16.msra.mxu0 0
    %163 = vmatprep.subr.bf16.mxu0 0
    %164 = vmatpush1.bf16.msra.mxu0 0
    %165 = vmatprep.subr.bf16.mxu0 0
    %166 = vmatpush1.bf16.msra.mxu0 0
    %167 = vmatprep.subr.bf16.mxu0 0
    %168 = vmatpush1.bf16.msra.mxu0 0
    %169 = vmatprep.subr.bf16.mxu0 0
    %170 = vmatpush1.bf16.msra.mxu0 0
    %171 = vmatprep.subr.bf16.mxu0 0
    %172 = vmatpush1.bf16.msra.mxu0 0
    %173 = vmatprep.subr.bf16.mxu0 0
    %174 = vmatpush1.bf16.msra.mxu0 0
    %175 = vmatprep.subr.bf16.mxu0 0
    %176 = vmatpush1.bf16.msra.mxu0 0
    %177 = vmatprep.subr.bf16.mxu0 0
    %178 = vmatpush1.bf16.msra.mxu0 0
    %179 = vmatprep.mubr.bf16.mxu0 0
    %180 = vmatmul.mubr.bf16.gmra.mrb[0].mxu0 %v145
    %v181 = vpop.f32.mrb[0].mxu0
    %v182 = vadd.f32 %v59, %v181
    %v183 = vpop.f32.mrb[0].mxu0
    %v184 = vpop.f32.mrb[0].mxu0
    %v185 = vpop.f32.mrb[0].mxu0
    %186 = vdwg.mxu0
    %v187 = vmax.f32 %v182, 0.0
    %v188 = vsel %vm112, %v187, 0.0
    %189 = vadd.xlane.f32.xlu0 %v188
    %v190 = vpop.xlane.xlu0 %189
    %v191 = vmul.f32 %v190, %v116
    %v192 = vsub.f32 %v187, %v191
    %v193 = vmul.f32 %v192, %v192
    %v194 = vsel %vm112, %v193, 0.0
    %195 = vadd.xlane.f32.xlu0 %v194
    %v196 = vpop.xlane.xlu0 %195
    %v197 = vmul.f32 %v196, %v116
    %v198 = vadd.f32 %v197, 1e-05
    %v199 = vrsqrt.pop %v198
    %v200 = vmul.f32 %v192, %v199
    %v201 = vmul.f32 %v200, %v131
    %v202 = vadd.f32 %v201, %v138
    %v203 = vadd.f32 %v141, %v202
    %s204 = scalar_lea.vmem %s0, 8
    %v205 = vld [vmem:[%s204] sm:$0xf]
    %v207 = vsel %vm67, %v205, 0
    %209 = vmatprep.subr.bf16.mxu0 0
    %210 = vmatpush1.bf16.msra.mxu0 %v65
    %211 = vmatprep.subr.bf16.mxu0 0
    %212 = vmatpush1.bf16.msra.mxu0 0
    %213 = vmatprep.subr.bf16.mxu0 0
    %214 = vmatpush1.bf16.msra.mxu0 0
    %215 = vmatprep.subr.bf16.mxu0 0
    %216 = vmatpush1.bf16.msra.mxu0 0
    %217 = vmatprep.subr.bf16.mxu0 0
    %218 = vmatpush1.bf16.msra.mxu0 0
    %219 = vmatprep.subr.bf16.mxu0 0
    %220 = vmatpush1.bf16.msra.mxu0 0
    %221 = vmatprep.subr.bf16.mxu0 0
    %222 = vmatpush1.bf16.msra.mxu0 0
    %223 = vmatprep.subr.bf16.mxu0 0
    %224 = vmatpush1.bf16.msra.mxu0 0
    %225 = vmatprep.subr.bf16.mxu0 0
    %226 = vmatpush1.bf16.msra.mxu0 0
    %227 = vmatprep.subr.bf16.mxu0 0
    %228 = vmatpush1.bf16.msra.mxu0 0
    %229 = vmatprep.subr.bf16.mxu0 0
    %230 = vmatpush1.bf16.msra.mxu0 0
    %231 = vmatprep.subr.bf16.mxu0 0
    %232 = vmatpush1.bf16.msra.mxu0 0
    %233 = vmatprep.subr.bf16.mxu0 0
    %234 = vmatpush1.bf16.msra.mxu0 0
    %235 = vmatprep.subr.bf16.mxu0 0
    %236 = vmatpush1.bf16.msra.mxu0 0
    %237 = vmatprep.subr.bf16.mxu0 0
    %238 = vmatpush1.bf16.msra.mxu0 0
    %239 = vmatprep.subr.bf16.mxu0 0
    %240 = vmatpush1.bf16.msra.mxu0 0
    %241 = vmatprep.mubr.bf16.mxu0 0
    %242 = vmatmul.mubr.bf16.gmra.mrb[0].mxu0 %v207
    %v243 = vpop.f32.mrb[0].mxu0
    %v244 = vadd.f32 %v59, %v243
    %v245 = vpop.f32.mrb[0].mxu0
    %v246 = vpop.f32.mrb[0].mxu0
    %v247 = vpop.f32.mrb[0].mxu0
    %248 = vdwg.mxu0
    %v249 = vmax.f32 %v244, 0.0
    %v250 = vsel %vm112, %v249, 0.0
    %251 = vadd.xlane.f32.xlu0 %v250
    %v252 = vpop.xlane.xlu0 %251
    %v253 = vmul.f32 %v252, %v116
    %v254 = vsub.f32 %v249, %v253
    %v255 = vmul.f32 %v254, %v254
    %v256 = vsel %vm112, %v255, 0.0
    %257 = vadd.xlane.f32.xlu0 %v256
    %v258 = vpop.xlane.xlu0 %257
    %v259 = vmul.f32 %v258, %v116
    %v260 = vadd.f32 %v259, 1e-05
    %v261 = vrsqrt.pop %v260
    %v262 = vmul.f32 %v254, %v261
    %v263 = vmul.f32 %v262, %v131
    %v264 = vadd.f32 %v263, %v138
    %v265 = vadd.f32 %v203, %v264
    %s266 = scalar_lea.vmem %s0, 12
    %v267 = vld [vmem:[%s266] sm:$0xf]
    %v269 = vsel %vm67, %v267, 0
    %271 = vmatprep.subr.bf16.mxu0 0
    %272 = vmatpush1.bf16.msra.mxu0 %v65
    %273 = vmatprep.subr.bf16.mxu0 0
    %274 = vmatpush1.bf16.msra.mxu0 0
    %275 = vmatprep.subr.bf16.mxu0 0
    %276 = vmatpush1.bf16.msra.mxu0 0
    %277 = vmatprep.subr.bf16.mxu0 0
    %278 = vmatpush1.bf16.msra.mxu0 0
    %279 = vmatprep.subr.bf16.mxu0 0
    %280 = vmatpush1.bf16.msra.mxu0 0
    %281 = vmatprep.subr.bf16.mxu0 0
    %282 = vmatpush1.bf16.msra.mxu0 0
    %283 = vmatprep.subr.bf16.mxu0 0
    %284 = vmatpush1.bf16.msra.mxu0 0
    %285 = vmatprep.subr.bf16.mxu0 0
    %286 = vmatpush1.bf16.msra.mxu0 0
    %287 = vmatprep.subr.bf16.mxu0 0
    %288 = vmatpush1.bf16.msra.mxu0 0
    %289 = vmatprep.subr.bf16.mxu0 0
    %290 = vmatpush1.bf16.msra.mxu0 0
    %291 = vmatprep.subr.bf16.mxu0 0
    %292 = vmatpush1.bf16.msra.mxu0 0
    %293 = vmatprep.subr.bf16.mxu0 0
    %294 = vmatpush1.bf16.msra.mxu0 0
    %295 = vmatprep.subr.bf16.mxu0 0
    %296 = vmatpush1.bf16.msra.mxu0 0
    %297 = vmatprep.subr.bf16.mxu0 0
    %298 = vmatpush1.bf16.msra.mxu0 0
    %299 = vmatprep.subr.bf16.mxu0 0
    %300 = vmatpush1.bf16.msra.mxu0 0
    %301 = vmatprep.subr.bf16.mxu0 0
    %302 = vmatpush1.bf16.msra.mxu0 0
    %303 = vmatprep.mubr.bf16.mxu0 0
    %304 = vmatmul.mubr.bf16.gmra.mrb[0].mxu0 %v269
    %v305 = vpop.f32.mrb[0].mxu0
    %v306 = vadd.f32 %v59, %v305
    %v307 = vpop.f32.mrb[0].mxu0
    %v308 = vpop.f32.mrb[0].mxu0
    %v309 = vpop.f32.mrb[0].mxu0
    %310 = vdwg.mxu0
    %v311 = vmax.f32 %v306, 0.0
    %v312 = vsel %vm112, %v311, 0.0
    %313 = vadd.xlane.f32.xlu0 %v312
    %v314 = vpop.xlane.xlu0 %313
    %v315 = vmul.f32 %v314, %v116
    %v316 = vsub.f32 %v311, %v315
    %v317 = vmul.f32 %v316, %v316
    %v318 = vsel %vm112, %v317, 0.0
    %319 = vadd.xlane.f32.xlu0 %v318
    %v320 = vpop.xlane.xlu0 %319
    %v321 = vmul.f32 %v320, %v116
    %v322 = vadd.f32 %v321, 1e-05
    %v323 = vrsqrt.pop %v322
    %v324 = vmul.f32 %v316, %v323
    %v325 = vmul.f32 %v324, %v131
    %v326 = vadd.f32 %v325, %v138
    %v327 = vadd.f32 %v265, %v326
    %v328 = vmul.f32 %v327, 0.25
    %v329 = vpack.c.bf16 %v328, %v328
    %v330 = vld [vmem:[%s5] sm:$0xf]
    %v331 = vld [vmem:[%s5 + $0x4] sm:$0xf]
    %v332 = vld [vmem:[%s5 + $0x8] sm:$0xf]
    %v333 = vld [vmem:[%s5 + $0xc] sm:$0xf]
    %v334 = vld [vmem:[%s6] sm:$0x1]
    %v336 = vlaneseq
    %v337 = vshrl.u32 %v336, 7
    %v338 = vsub.s32 0, %v337
    %v339 = vrot.slane %v334, %v338
    %v345 = vunpack.c.l.b16 %v330
    %v346 = vunpack.c.l.b16 %v331
    %v347 = vunpack.c.l.b16 %v332
    %v348 = vunpack.c.l.b16 %v333
    %v349 = vpack.c.b16 %v346, %v345
    %v350 = vpack.c.b16 %v348, %v347
    %v354 = vsel %vm112, %v329, 0
    %356 = vmatprep.subr.bf16.mxu0 0
    %357 = vmatpush1.bf16.msra.mxu0 %v349
    %358 = vmatprep.subr.bf16.mxu0 0
    %359 = vmatpush1.bf16.msra.mxu0 %v350
    %360 = vmatprep.subr.bf16.mxu0 0
    %361 = vmatpush1.bf16.msra.mxu0 0
    %362 = vmatprep.subr.bf16.mxu0 0
    %363 = vmatpush1.bf16.msra.mxu0 0
    %364 = vmatprep.subr.bf16.mxu0 0
    %365 = vmatpush1.bf16.msra.mxu0 0
    %366 = vmatprep.subr.bf16.mxu0 0
    %367 = vmatpush1.bf16.msra.mxu0 0
    %368 = vmatprep.subr.bf16.mxu0 0
    %369 = vmatpush1.bf16.msra.mxu0 0
    %370 = vmatprep.subr.bf16.mxu0 0
    %371 = vmatpush1.bf16.msra.mxu0 0
    %372 = vmatprep.subr.bf16.mxu0 0
    %373 = vmatpush1.bf16.msra.mxu0 0
    %374 = vmatprep.subr.bf16.mxu0 0
    %375 = vmatpush1.bf16.msra.mxu0 0
    %376 = vmatprep.subr.bf16.mxu0 0
    %377 = vmatpush1.bf16.msra.mxu0 0
    %378 = vmatprep.subr.bf16.mxu0 0
    %379 = vmatpush1.bf16.msra.mxu0 0
    %380 = vmatprep.subr.bf16.mxu0 0
    %381 = vmatpush1.bf16.msra.mxu0 0
    %382 = vmatprep.subr.bf16.mxu0 0
    %383 = vmatpush1.bf16.msra.mxu0 0
    %384 = vmatprep.subr.bf16.mxu0 0
    %385 = vmatpush1.bf16.msra.mxu0 0
    %386 = vmatprep.subr.bf16.mxu0 0
    %387 = vmatpush1.bf16.msra.mxu0 0
    %388 = vmatprep.mubr.bf16.mxu0 0
    %389 = vmatmul.mubr.bf16.gmra.mrb[0].mxu0 %v354
    %v390 = vpop.f32.mrb[0].mxu0
    %v391 = vadd.f32 %v339, %v390
    %v392 = vpop.f32.mrb[0].mxu0
    %v393 = vpop.f32.mrb[0].mxu0
    %v394 = vpop.f32.mrb[0].mxu0
    %395 = vdwg.mxu0
    %396 = vst [vmem:[#allocation4] sm:$0xff] %v391
    %v397 = vpack.c.bf16 %v391, %v391
    %v398 = vld [vmem:[%s7] sm:$0xf]
    %v399 = vld [vmem:[%s7 + $0x4] sm:$0xf]
    %v400 = vld [vmem:[%s7 + $0x8] sm:$0xf]
    %v401 = vld [vmem:[%s7 + $0xc] sm:$0xf]
    %v402 = vld [vmem:[%s7 + $0x10] sm:$0xf]
    %v403 = vld [vmem:[%s7 + $0x14] sm:$0xf]
    %v404 = vld [vmem:[%s7 + $0x18] sm:$0xf]
    %v405 = vld [vmem:[%s7 + $0x1c] sm:$0xf]
    %v406 = vld [vmem:[%s7 + $0x20] sm:$0xf]
    %v407 = vld [vmem:[%s7 + $0x24] sm:$0xf]
    %v408 = vld [vmem:[%s7 + $0x28] sm:$0xf]
    %v409 = vld [vmem:[%s7 + $0x2c] sm:$0xf]
    %v410 = vld [vmem:[%s7 + $0x30] sm:$0xf]
    %v411 = vld [vmem:[%s7 + $0x34] sm:$0xf]
    %v412 = vld [vmem:[%s7 + $0x38] sm:$0xf]
    %v413 = vld [vmem:[%s7 + $0x3c] sm:$0xf]
    %v414 = vld [vmem:[%s8] sm:$0x1]
    %v416 = vlaneseq
    %v417 = vshrl.u32 %v416, 7
    %v418 = vsub.s32 0, %v417
    %v419 = vrot.slane %v414, %v418
    %v437 = vunpack.c.l.b16 %v398
    %v438 = vunpack.c.l.b16 %v399
    %v439 = vunpack.c.l.b16 %v400
    %v440 = vunpack.c.l.b16 %v401
    %v441 = vunpack.c.l.b16 %v402
    %v442 = vunpack.c.l.b16 %v403
    %v443 = vunpack.c.l.b16 %v404
    %v444 = vunpack.c.l.b16 %v405
    %v445 = vunpack.c.l.b16 %v406
    %v446 = vunpack.c.l.b16 %v407
    %v447 = vunpack.c.l.b16 %v408
    %v448 = vunpack.c.l.b16 %v409
    %v449 = vunpack.c.l.b16 %v410
    %v450 = vunpack.c.l.b16 %v411
    %v451 = vunpack.c.l.b16 %v412
    %v452 = vunpack.c.l.b16 %v413
    %v453 = vpack.c.b16 %v438, %v437
    %v454 = vpack.c.b16 %v440, %v439
    %v455 = vpack.c.b16 %v442, %v441
    %v456 = vpack.c.b16 %v444, %v443
    %v457 = vpack.c.b16 %v446, %v445
    %v458 = vpack.c.b16 %v448, %v447
    %v459 = vpack.c.b16 %v450, %v449
    %v460 = vpack.c.b16 %v452, %v451
    %469 = vmatprep.subr.bf16.mxu0 0
    %470 = vmatpush1.bf16.msra.mxu0 %v453
    %471 = vmatprep.subr.bf16.mxu0 0
    %472 = vmatpush1.bf16.msra.mxu0 %v454
    %473 = vmatprep.subr.bf16.mxu0 0
    %474 = vmatpush1.bf16.msra.mxu0 %v455
    %475 = vmatprep.subr.bf16.mxu0 0
    %476 = vmatpush1.bf16.msra.mxu0 %v456
    %477 = vmatprep.subr.bf16.mxu0 0
    %478 = vmatpush1.bf16.msra.mxu0 %v457
    %479 = vmatprep.subr.bf16.mxu0 0
    %480 = vmatpush1.bf16.msra.mxu0 %v458
    %481 = vmatprep.subr.bf16.mxu0 0
    %482 = vmatpush1.bf16.msra.mxu0 %v459
    %483 = vmatprep.subr.bf16.mxu0 0
    %484 = vmatpush1.bf16.msra.mxu0 %v460
    %485 = vmatprep.subr.bf16.mxu0 0
    %486 = vmatpush1.bf16.msra.mxu0 0
    %487 = vmatprep.subr.bf16.mxu0 0
    %488 = vmatpush1.bf16.msra.mxu0 0
    %489 = vmatprep.subr.bf16.mxu0 0
    %490 = vmatpush1.bf16.msra.mxu0 0
    %491 = vmatprep.subr.bf16.mxu0 0
    %492 = vmatpush1.bf16.msra.mxu0 0
    %493 = vmatprep.subr.bf16.mxu0 0
    %494 = vmatpush1.bf16.msra.mxu0 0
    %495 = vmatprep.subr.bf16.mxu0 0
    %496 = vmatpush1.bf16.msra.mxu0 0
    %497 = vmatprep.subr.bf16.mxu0 0
    %498 = vmatpush1.bf16.msra.mxu0 0
    %499 = vmatprep.subr.bf16.mxu0 0
    %500 = vmatpush1.bf16.msra.mxu0 0
    %501 = vmatprep.mubr.bf16.mxu0 0
    %502 = vmatmul.mubr.bf16.gmra.mrb[0].mxu0 %v397
    %v503 = vpop.f32.mrb[0].mxu0
    %v504 = vadd.f32 %v419, %v503
    %v505 = vpop.f32.mrb[0].mxu0
    %v506 = vpop.f32.mrb[0].mxu0
    %v507 = vpop.f32.mrb[0].mxu0
    %508 = vdwg.mxu0
    %v509 = vmax.f32 %v504, 0.0
    %v510 = vld [vmem:[%s9] sm:$0x1]
    %v511 = vld [vmem:[%s10] sm:$0x1]
    %v512 = vsel %vm112, %v509, 0.0
    %513 = vadd.xlane.f32.xlu0 %v512
    %v514 = vpop.xlane.xlu0 %513
    %v515 = vmul.f32 %v514, %v116
    %v516 = vsub.f32 %v509, %v515
    %v517 = vmul.f32 %v516, %v516
    %v518 = vsel %vm112, %v517, 0.0
    %519 = vadd.xlane.f32.xlu0 %v518
    %v520 = vpop.xlane.xlu0 %519
    %v521 = vmul.f32 %v520, %v116
    %v522 = vadd.f32 %v521, 1e-05
    %v523 = vrsqrt.pop %v522
    %v524 = vmul.f32 %v516, %v523
    %v526 = vlaneseq
    %v527 = vshrl.u32 %v526, 7
    %v528 = vsub.s32 0, %v527
    %v529 = vrot.slane %v510, %v528
    %v531 = vmul.f32 %v524, %v529
    %v533 = vlaneseq
    %v534 = vshrl.u32 %v533, 7
    %v535 = vsub.s32 0, %v534
    %v536 = vrot.slane %v511, %v535
    %v538 = vadd.f32 %v531, %v536
    %v539 = vpack.c.bf16 %v538, %v538
    %v540 = vld [vmem:[%s11] sm:$0xf]
    %v541 = vld [vmem:[%s11 + $0x4] sm:$0xf]
    %v542 = vld [vmem:[%s11 + $0x8] sm:$0xf]
    %v543 = vld [vmem:[%s11 + $0xc] sm:$0xf]
    %v544 = vld [vmem:[%s12] sm:$0x1]
    %v546 = vlaneseq
    %v547 = vshrl.u32 %v546, 7
    %v548 = vsub.s32 0, %v547
    %v549 = vrot.slane %v544, %v548
    %v555 = vunpack.c.l.b16 %v540
    %v556 = vunpack.c.l.b16 %v541
    %v557 = vunpack.c.l.b16 %v542
    %v558 = vunpack.c.l.b16 %v543
    %v559 = vpack.c.b16 %v556, %v555
    %v560 = vpack.c.b16 %v558, %v557
    %v564 = vsel %vm112, %v539, 0
    %566 = vmatprep.subr.bf16.mxu0 0
    %567 = vmatpush1.bf16.msra.mxu0 %v559
    %568 = vmatprep.subr.bf16.mxu0 0
    %569 = vmatpush1.bf16.msra.mxu0 %v560
    %570 = vmatprep.subr.bf16.mxu0 0
    %571 = vmatpush1.bf16.msra.mxu0 0
    %572 = vmatprep.subr.bf16.mxu0 0
    %573 = vmatpush1.bf16.msra.mxu0 0
    %574 = vmatprep.subr.bf16.mxu0 0
    %575 = vmatpush1.bf16.msra.mxu0 0
    %576 = vmatprep.subr.bf16.mxu0 0
    %577 = vmatpush1.bf16.msra.mxu0 0
    %578 = vmatprep.subr.bf16.mxu0 0
    %579 = vmatpush1.bf16.msra.mxu0 0
    %580 = vmatprep.subr.bf16.mxu0 0
    %581 = vmatpush1.bf16.msra.mxu0 0
    %582 = vmatprep.subr.bf16.mxu0 0
    %583 = vmatpush1.bf16.msra.mxu0 0
    %584 = vmatprep.subr.bf16.mxu0 0
    %585 = vmatpush1.bf16.msra.mxu0 0
    %586 = vmatprep.subr.bf16.mxu0 0
    %587 = vmatpush1.bf16.msra.mxu0 0
    %588 = vmatprep.subr.bf16.mxu0 0
    %589 = vmatpush1.bf16.msra.mxu0 0
    %590 = vmatprep.subr.bf16.mxu0 0
    %591 = vmatpush1.bf16.msra.mxu0 0
    %592 = vmatprep.subr.bf16.mxu0 0
    %593 = vmatpush1.bf16.msra.mxu0 0
    %594 = vmatprep.subr.bf16.mxu0 0
    %595 = vmatpush1.bf16.msra.mxu0 0
    %596 = vmatprep.subr.bf16.mxu0 0
    %597 = vmatpush1.bf16.msra.mxu0 0
    %598 = vmatprep.mubr.bf16.mxu0 0
    %599 = vmatmul.mubr.bf16.gmra.mrb[0].mxu0 %v564
    %v600 = vpop.f32.mrb[0].mxu0
    %v601 = vadd.f32 %v549, %v600
    %v602 = vpop.f32.mrb[0].mxu0
    %v603 = vpop.f32.mrb[0].mxu0
    %v604 = vpop.f32.mrb[0].mxu0
    %605 = vdwg.mxu0
    %606 = vst [vmem:[#allocation2] sm:$0xff] %v601
    // Predicated region
    $region54: #{tpu_custom_call.1} parent=1 // pred_check
      _
    $region55: #{tpu_custom_call.1} parent=1 // pred_check_branch
      %608 = sbr.rel (0) target = $region57
    $region56: #{tpu_custom_call.1} parent=1 // pred_region
      %s610 = ssub.s32 128, 128
      %611 = vsyncadd [#allocation3], %s610
      %s613 = sshll.u32 [#allocation2], 4
      %s614 = int_to_ptr.vmem [resolvable:$true] %s613
      %616 = dma.vmem_to_hbm [thread:$0]  %s614, 128, %s13, [#allocation3]
    $region57: #{tpu_custom_call.1} parent=1 // pred_fallthru
      _
    // Predicated region
    $region58: #{tpu_custom_call.1} parent=1 // pred_check
      _
    $region59: #{tpu_custom_call.1} parent=1 // pred_check_branch
      %618 = sbr.rel (0) target = $region61
    $region60: #{tpu_custom_call.1} parent=1 // pred_region
      %s620 = ssub.s32 128, 128
      %621 = vsyncadd [#allocation5], %s620
      %s623 = sshll.u32 [#allocation4], 4
      %s624 = int_to_ptr.vmem [resolvable:$true] %s623
      %626 = dma.vmem_to_hbm [thread:$0]  %s624, 128, %s14, [#allocation5]
    $region61: #{tpu_custom_call.1} parent=1 // pred_fallthru
      _
    // Predicated region
    $region62: #{tpu_custom_call.1} parent=1 // pred_check
      _
    $region63: #{tpu_custom_call.1} parent=1 // pred_check_branch
      %628 = sbr.rel (0) target = $region65
    $region64: #{tpu_custom_call.1} parent=1 // pred_region
      %629 = dma.done [#allocation3], 128
    $region65: #{tpu_custom_call.1} parent=1 // pred_fallthru
      _
    // Predicated region
    $region66: #{tpu_custom_call.1} parent=1 // pred_check
      _
    $region67: #{tpu_custom_call.1} parent=1 // pred_check_branch
      %631 = sbr.rel (0) target = $region69
    $region68: #{tpu_custom_call.1} parent=1 // pred_region
      %632 = dma.done [#allocation5], 128
    $region69: #{tpu_custom_call.1} parent=1 // pred_fallthru
      _
    %633 = vsyncpa [#allocation3], 1
    %634 = vsyncpa [#allocation5], 1

</llo_original>
